<compile_context>
chip_gen: v5e
topology: v5e:2x2
jax: 0.10.0
libtpu: 0.0.40
codegen_flags: <defaults>
</compile_context>

<pallas_src>
import math

import jax
import jax.numpy as jnp
from jax.experimental import pallas as pl
from jax.experimental.pallas import tpu as pltpu


def _round_up(x, m):
    return ((x + m - 1) // m) * m


def _pick_frames_per_tile(L, upp, *, max_tc=8192, max_e_bytes=4 << 20):
    """Largest frame tile whose sample width is lane aligned and VMEM friendly."""
    valid = []
    for c in range(1, L + 1):
        if L % c != 0:
            continue
        tc = c * upp
        if tc % 128 != 0 and c != L:
            continue
        valid.append(c)
    fitting = [c for c in valid
               if c * upp <= max_tc and c * (c * upp) * 4 <= max_e_bytes]
    if fitting:
        return max(fitting)
    return min(valid)


def make_sinegen_kernel(*, dim, dimp, sine_amp, noise_std):
    """Kernel body; all sizes/constants are static Python values."""
    two_pi = 2.0 * math.pi
    uv_row = 2 * dimp

    def kernel(frames_ref, e_ref, u_ref, rnd_ref, out_ref, noise_ref):
        # frames_ref: (1, 1, Rpad, Lc) per-frame data:
        #   rows [0 : dim)          A  = frac(phase at first sample of frame)
        #   rows [dimp : dimp+dim)  D  = frac(per-sample phase increment)
        #   row  [2*dimp]           uv = voiced flag (0/1)
        # e_ref: (Lc, Tc) one-hot nearest-upsample matrix E[l, t] = (t//upp == l)
        # u_ref: (1, Tc)  sample-within-frame index  u = t - upp*(t//upp)
        frames = frames_ref[0, 0]                           # (Rpad, Lc)

        # Single tiny MXU matmul nearest-upsamples every per-frame row to
        # sample rate (exact: E is one-hot).  MXU is otherwise idle here.
        up = jnp.dot(frames, e_ref[...],
                     preferred_element_type=jnp.float32)    # (Rpad, Tc)
        a = up[0:dimp, :]
        d = up[dimp:2 * dimp, :]
        uv = up[uv_row:uv_row + 1, :]                       # (1, Tc), exact 0/1

        # sin is 2*pi periodic, so only frac(phase) matters; the reference's
        # wrap-shift cumsum only adds integers and is dropped entirely.
        phase = a + u_ref[...] * d                          # (dimp, Tc)
        phase = phase - jnp.floor(phase)
        sine = jnp.sin(phase * two_pi) * sine_amp           # (dimp, Tc)

        noise_amp = uv * noise_std + (1.0 - uv) * (sine_amp / 3.0)
        noise = noise_amp * rnd_ref[0]                      # (dim, Tc)
        out_ref[0] = sine[0:dim, :] * uv + noise
        noise_ref[0] = noise

    return kernel


def sine_gen_forward(f0, upp, *, samp_rate, harmonic_num=0, sine_amp=0.1,
                     noise_std=0.003, voiced_threshold=0.0,
                     rand_ini=None, noise_key=None, frames_per_tile=None,
                     channel_major_output=False):
    """JAX/Pallas equivalent of SineGen.forward.  f0: (B, L) float32."""
    f0 = jnp.asarray(f0, jnp.float32)
    B, L = f0.shape
    dim = harmonic_num + 1
    dimp = _round_up(dim, 8)
    rpad = 2 * dimp + 8
    T = L * upp

    if noise_key is None:
        noise_key = jax.random.PRNGKey(0)
    if rand_ini is None:
        k_rand, noise_key = jax.random.split(noise_key)
        rand_ini = jax.random.uniform(k_rand, (B, dim), dtype=jnp.float32)
        rand_ini = rand_ini.at[:, 0].set(0.0)
    rand_ini = jnp.asarray(rand_ini, jnp.float32)

    if frames_per_tile is None:
        Lc = _pick_frames_per_tile(L, upp)
    else:
        Lc = frames_per_tile
    assert L % Lc == 0, "frames_per_tile must divide L"
    Tc = Lc * upp
    assert Tc == T or Tc % 128 == 0, "time tile must be lane aligned (128)"
    num_tiles = L // Lc

    # ---- Per-frame phase data: tiny (B, L, dim) arrays, computed in XLA ----
    harm = jnp.arange(1, dim + 1, dtype=jnp.float32)
    rad = jnp.mod(f0[:, :, None] * harm[None, None, :] / samp_rate, 1.0)
    rad = rad.at[:, 0, :].add(rand_ini)                     # random initial phase
    csum = jnp.cumsum(rad, axis=1)                          # inclusive frame cumsum
    s_excl = jnp.concatenate(
        [jnp.zeros((B, 1, dim), jnp.float32), csum[:, :-1, :]], axis=1)
    # Phase of the first sample of frame l (mod 1) and per-sample increment
    # (mod 1): discarding integer parts never changes sin(2*pi*phase).
    a = jnp.mod(upp * jnp.mod(s_excl, 1.0) + rad, 1.0)      # (B, L, dim)
    d = jnp.mod(rad, 1.0)                                   # (B, L, dim)
    uv_l = (f0 > voiced_threshold).astype(jnp.float32)      # (B, L)

    def to_tiles(x):                     # (B, L, dim) -> (B, num_tiles, dim, Lc)
        return x.reshape(B, num_tiles, Lc, dim).transpose(0, 1, 3, 2)

    frames = jnp.zeros((B, num_tiles, rpad, Lc), jnp.float32)
    frames = frames.at[:, :, 0:dim, :].set(to_tiles(a))
    frames = frames.at[:, :, dimp:dimp + dim, :].set(to_tiles(d))
    frames = frames.at[:, :, 2 * dimp, :].set(uv_l.reshape(B, num_tiles, Lc))

    # Constant (tile-periodic) upsample helpers: exact integer math in XLA.
    t_idx = jnp.arange(Tc, dtype=jnp.int32)
    frame_of_t = t_idx // upp
    u_vec = (t_idx - frame_of_t * upp).astype(jnp.float32).reshape(1, Tc)
    e_mat = (jnp.arange(Lc, dtype=jnp.int32)[:, None]
             == frame_of_t[None, :]).astype(jnp.float32)    # (Lc, Tc)

    # Standard-normal noise streamed from HBM.
    # TODO(synk): on-chip pltpu PRNG (prng_seed/prng_random_bits) would avoid
    # this HBM read but has no interpret-mode lowering in this environment.
    rnd = jax.random.normal(noise_key, (B, dim, T), dtype=jnp.float32)

    kernel = make_sinegen_kernel(dim=dim, dimp=dimp,
                                 sine_amp=sine_amp, noise_std=noise_std)

    out_cd, noise_cd = pl.pallas_call(
        kernel,
        out_shape=(
            jax.ShapeDtypeStruct((B, dim, T), jnp.float32),  # sine*uv + noise
            jax.ShapeDtypeStruct((B, dim, T), jnp.float32),  # noise
        ),
        grid=(B, num_tiles),
        in_specs=[
            pl.BlockSpec((1, 1, rpad, Lc), lambda b, j: (b, j, 0, 0)),
            pl.BlockSpec((Lc, Tc), lambda b, j: (0, 0)),     # constant, resident
            pl.BlockSpec((1, Tc), lambda b, j: (0, 0)),      # constant, resident
            pl.BlockSpec((1, dim, Tc), lambda b, j: (b, 0, j)),
        ],
        out_specs=(
            pl.BlockSpec((1, dim, Tc), lambda b, j: (b, 0, j)),
            pl.BlockSpec((1, dim, Tc), lambda b, j: (b, 0, j)),
        ),
        compiler_params=pltpu.CompilerParams(
            dimension_semantics=("parallel", "parallel")),
    )(frames, e_mat, u_vec, rnd)

    uv = jnp.repeat(uv_l, upp, axis=1)[:, :, None]           # (B, T, 1)
    if channel_major_output:
        # (B, dim, T): avoids the transpose HBM round-trip for channel-wise
        # downstream consumers (preferred on v5e).
        return out_cd, uv, noise_cd
    sine_waves = jnp.transpose(out_cd, (0, 2, 1))             # (B, T, dim)
    noise = jnp.transpose(noise_cd, (0, 2, 1))                # (B, T, dim)
    return sine_waves, uv, noise


def sine_gen_reference(f0, upp, rand_ini, *, samp_rate, harmonic_num,
                       sine_amp, voiced_threshold):
    """Pure-JAX port of SineGen.forward (deterministic part, no noise)."""
    f0 = jnp.asarray(f0, jnp.float32)
    B, L = f0.shape
    dim = harmonic_num + 1
    T = L * upp
    harm = jnp.arange(1, dim + 1, dtype=jnp.float32)
    f0_buf = f0[:, :, None] * harm[None, None, :]
    rad = (f0_buf / samp_rate) % 1.0
    rad = rad.at[:, 0, :].add(rand_ini)
    tmp = jnp.cumsum(rad, axis=1) * upp
    if T > 1 and L > 1:
        pos = jnp.arange(T, dtype=jnp.float32) * ((L - 1) / (T - 1))
        i0 = jnp.clip(jnp.floor(pos).astype(jnp.int32), 0, L - 1)
        i1 = jnp.clip(i0 + 1, 0, L - 1)
        w1 = pos - i0.astype(jnp.float32)
        tmp_up = (tmp[:, i0, :] * (1.0 - w1)[None, :, None]
                  + tmp[:, i1, :] * w1[None, :, None])
    else:
        tmp_up = jnp.repeat(tmp, upp, axis=1)
    rad_up = jnp.repeat(rad, upp, axis=1)
    tmp_up = tmp_up % 1.0
    neg = (tmp_up[:, 1:, :] - tmp_up[:, :-1, :]) < 0
    shift = jnp.concatenate(
        [jnp.zeros((B, 1, dim), jnp.float32), jnp.where(neg, -1.0, 0.0)],
        axis=1)
    phase = jnp.cumsum(rad_up + shift, axis=1)
    sine = jnp.sin(phase * 2.0 * jnp.pi) * sine_amp
    uv = (f0 > voiced_threshold).astype(jnp.float32)[:, :, None]
    uv = jnp.repeat(uv, upp, axis=1)
    return sine, uv


if __name__ == "__main__":
    key = jax.random.PRNGKey(0)
    B, L, upp = 2, 16, 16
    harmonic_num = 4
    samp_rate = 16000
    sine_amp, noise_std, voiced_threshold = 0.1, 0.003, 0.0
    dim = harmonic_num + 1
    T = L * upp

    kf, kv, kr, ks = jax.random.split(key, 4)
    # F0 in a realistic range with some unvoiced (zero) frames.
    f0 = jax.random.uniform(kf, (B, L), minval=80.0, maxval=400.0,
                            dtype=jnp.float32)
    voiced = (jax.random.uniform(kv, (B, L)) > 0.25).astype(jnp.float32)
    f0 = f0 * voiced

    rand_ini = jax.random.uniform(kr, (B, dim), dtype=jnp.float32)
    rand_ini = rand_ini.at[:, 0].set(0.0)

    sine, uv, noise = sine_gen_forward(
        f0, upp, samp_rate=samp_rate, harmonic_num=harmonic_num,
        sine_amp=sine_amp, noise_std=noise_std,
        voiced_threshold=voiced_threshold, rand_ini=rand_ini, noise_key=ks)
    jax.block_until_ready((sine, uv, noise))

    assert sine.shape == (B, T, dim) and sine.dtype == jnp.float32
    assert uv.shape == (B, T, 1) and uv.dtype == jnp.float32
    assert noise.shape == (B, T, dim) and noise.dtype == jnp.float32
    assert bool(jnp.all(jnp.isfinite(sine)))
    assert bool(jnp.all(jnp.isfinite(noise)))

    # Deterministic part vs pure-JAX reference: out - noise == sine_ref * uv.
    sine_ref, uv_ref = sine_gen_reference(
        f0, upp, rand_ini, samp_rate=samp_rate, harmonic_num=harmonic_num,
        sine_amp=sine_amp, voiced_threshold=voiced_threshold)
    assert bool(jnp.allclose(uv, uv_ref, atol=1e-6))
    assert bool(jnp.allclose(sine - noise, sine_ref * uv_ref, atol=2e-4))

    # Noise path: exact reconstruction from the known key.
    rnd_chk = jax.random.normal(ks, (B, dim, T), dtype=jnp.float32)
    namp = uv_ref[:, :, 0] * noise_std + (1.0 - uv_ref[:, :, 0]) * (sine_amp / 3.0)
    noise_exp = namp[:, :, None] * jnp.transpose(rnd_chk, (0, 2, 1))
    assert bool(jnp.allclose(noise, noise_exp, atol=1e-6))
    assert float(jnp.std(noise)) > 0.0

    # Tiling invariance: two time tiles of 128 samples must match one 256 tile.
    sine2, uv2, noise2 = sine_gen_forward(
        f0, upp, samp_rate=samp_rate, harmonic_num=harmonic_num,
        sine_amp=sine_amp, noise_std=noise_std,
        voiced_threshold=voiced_threshold, rand_ini=rand_ini, noise_key=ks,
        frames_per_tile=8)
    jax.block_until_ready((sine2, uv2, noise2))
    assert bool(jnp.allclose(sine, sine2, atol=1e-6))
    assert bool(jnp.allclose(noise, noise2, atol=1e-6))

    print("KERNEL_OK")
</pallas_src>

<mosaic_0001>
module attributes {stable_mosaic.version = 11 : i64} {
  func.func @kernel(%arg0: i32, %arg1: i32, %arg2: memref<1x1x24x16xf32, #tpu.memory_space<vmem>>, %arg3: memref<16x256xf32, #tpu.memory_space<vmem>>, %arg4: memref<1x256xf32, #tpu.memory_space<vmem>>, %arg5: memref<1x5x256xf32, #tpu.memory_space<vmem>>, %arg6: memref<1x5x256xf32, #tpu.memory_space<vmem>>, %arg7: memref<1x5x256xf32, #tpu.memory_space<vmem>>) attributes {dimension_semantics = [#tpu.dimension_semantics<parallel>, #tpu.dimension_semantics<parallel>], iteration_bounds = array<i64: 2, 1>, scalar_prefetch = 0 : i64, scratch_operands = 0 : i64, tpu.core_type = #tpu.core_type<tc>, window_params = [{transform_indices = @transform_0, window_bounds = array<i64: 1, 1, 24, 16>}, {pipeline_mode = #tpu.pipeline_mode<synchronous>, transform_indices = @transform_1, window_bounds = array<i64: 16, 256>}, {pipeline_mode = #tpu.pipeline_mode<synchronous>, transform_indices = @transform_2, window_bounds = array<i64: 1, 256>}, {transform_indices = @transform_3, window_bounds = array<i64: 1, 5, 256>}, {transform_indices = @transform_4, window_bounds = array<i64: 1, 5, 256>}, {transform_indices = @transform_5, window_bounds = array<i64: 1, 5, 256>}]} {
    %c0 = arith.constant 0 : index
    %c0_0 = arith.constant 0 : index
    %c0_1 = arith.constant 0 : index
    %c0_2 = arith.constant 0 : index
    %0 = vector.load %arg2[%c0, %c0_0, %c0_1, %c0_2] : memref<1x1x24x16xf32, #tpu.memory_space<vmem>>, vector<1x1x24x16xf32>
    %1 = vector.shape_cast %0 : vector<1x1x24x16xf32> to vector<24x16xf32>
    %c0_3 = arith.constant 0 : index
    %c0_4 = arith.constant 0 : index
    %2 = vector.load %arg3[%c0_3, %c0_4] : memref<16x256xf32, #tpu.memory_space<vmem>>, vector<16x256xf32>
    %cst = arith.constant dense<0.000000e+00> : vector<24x256xf32>
    %3 = tpu.matmul %1, %2, %cst {dimension_numbers = #tpu.dot_dimension_numbers<[1], [0], [0], [1], [0, 0, 1, 1], [], []>} : vector<24x16xf32>, vector<16x256xf32>, vector<24x256xf32> -> vector<24x256xf32>
    %4 = vector.extract_strided_slice %3 {offsets = [0, 0], sizes = [8, 256], strides = [1, 1]} : vector<24x256xf32> to vector<8x256xf32>
    %5 = vector.extract_strided_slice %3 {offsets = [8, 0], sizes = [8, 256], strides = [1, 1]} : vector<24x256xf32> to vector<8x256xf32>
    %6 = vector.extract_strided_slice %3 {offsets = [16, 0], sizes = [1, 256], strides = [1, 1]} : vector<24x256xf32> to vector<1x256xf32>
    %c0_5 = arith.constant 0 : index
    %c0_6 = arith.constant 0 : index
    %7 = vector.load %arg4[%c0_5, %c0_6] : memref<1x256xf32, #tpu.memory_space<vmem>>, vector<1x256xf32>
    %8 = vector.broadcast %7 : vector<1x256xf32> to vector<8x256xf32>
    %9 = arith.mulf %8, %5 : vector<8x256xf32>
    %10 = arith.addf %4, %9 : vector<8x256xf32>
    %11 = math.floor %10 : vector<8x256xf32>
    %12 = arith.subf %10, %11 : vector<8x256xf32>
    %cst_7 = arith.constant 6.28318548 : f32
    %13 = vector.broadcast %cst_7 : f32 to vector<8x256xf32>
    %14 = arith.mulf %12, %13 : vector<8x256xf32>
    %15 = math.sin %14 : vector<8x256xf32>
    %cst_8 = arith.constant 1.000000e-01 : f32
    %16 = vector.broadcast %cst_8 : f32 to vector<8x256xf32>
    %17 = arith.mulf %15, %16 : vector<8x256xf32>
    %cst_9 = arith.constant 3.000000e-03 : f32
    %18 = vector.broadcast %cst_9 : f32 to vector<1x256xf32>
    %19 = arith.mulf %6, %18 : vector<1x256xf32>
    %cst_10 = arith.constant 1.000000e+00 : f32
    %20 = vector.broadcast %cst_10 : f32 to vector<1x256xf32>
    %21 = arith.subf %20, %6 : vector<1x256xf32>
    %cst_11 = arith.constant 0.0333333351 : f32
    %22 = vector.broadcast %cst_11 : f32 to vector<1x256xf32>
    %23 = arith.mulf %21, %22 : vector<1x256xf32>
    %24 = arith.addf %19, %23 : vector<1x256xf32>
    %c0_12 = arith.constant 0 : index
    %c0_13 = arith.constant 0 : index
    %c0_14 = arith.constant 0 : index
    %25 = vector.load %arg5[%c0_12, %c0_13, %c0_14] : memref<1x5x256xf32, #tpu.memory_space<vmem>>, vector<1x5x256xf32>
    %26 = vector.shape_cast %25 : vector<1x5x256xf32> to vector<5x256xf32>
    %27 = vector.broadcast %24 : vector<1x256xf32> to vector<5x256xf32>
    %28 = arith.mulf %27, %26 : vector<5x256xf32>
    %29 = vector.extract_strided_slice %17 {offsets = [0, 0], sizes = [5, 256], strides = [1, 1]} : vector<8x256xf32> to vector<5x256xf32>
    %30 = vector.broadcast %6 : vector<1x256xf32> to vector<5x256xf32>
    %31 = arith.mulf %29, %30 : vector<5x256xf32>
    %32 = arith.addf %31, %28 : vector<5x256xf32>
    %c0_15 = arith.constant 0 : index
    %c0_16 = arith.constant 0 : index
    %c0_17 = arith.constant 0 : index
    %33 = vector.load %arg6[%c0_15, %c0_16, %c0_17] : memref<1x5x256xf32, #tpu.memory_space<vmem>>, vector<1x5x256xf32>
    %34 = vector.shape_cast %33 : vector<1x5x256xf32> to vector<5x256xf32>
    %35 = vector.shape_cast %32 : vector<5x256xf32> to vector<1x5x256xf32>
    tpu.vector_store %arg6[%c0_15, %c0_16, %c0_17], %35 {strides = array<i32>} : memref<1x5x256xf32, #tpu.memory_space<vmem>>, vector<1x5x256xf32>,
    %c0_18 = arith.constant 0 : index
    %c0_19 = arith.constant 0 : index
    %c0_20 = arith.constant 0 : index
    %36 = vector.load %arg7[%c0_18, %c0_19, %c0_20] : memref<1x5x256xf32, #tpu.memory_space<vmem>>, vector<1x5x256xf32>
    %37 = vector.shape_cast %36 : vector<1x5x256xf32> to vector<5x256xf32>
    %38 = vector.shape_cast %28 : vector<5x256xf32> to vector<1x5x256xf32>
    tpu.vector_store %arg7[%c0_18, %c0_19, %c0_20], %38 {strides = array<i32>} : memref<1x5x256xf32, #tpu.memory_space<vmem>>, vector<1x5x256xf32>,
    return
  }
  func.func @transform_0(%arg0: i32, %arg1: i32) -> (i32, i32, i32, i32) {
    %c0_i32 = arith.constant 0 : i32
    %c0_i32_0 = arith.constant 0 : i32
    %c0_i32_1 = arith.constant 0 : i32
    return %arg0, %arg1, %c0_i32, %c0_i32_0 : i32, i32, i32, i32
  }
  func.func @transform_1(%arg0: i32, %arg1: i32) -> (i32, i32) {
    %c0_i32 = arith.constant 0 : i32
    %c0_i32_0 = arith.constant 0 : i32
    %c0_i32_1 = arith.constant 0 : i32
    return %c0_i32, %c0_i32_0 : i32, i32
  }
  func.func @transform_2(%arg0: i32, %arg1: i32) -> (i32, i32) {
    %c0_i32 = arith.constant 0 : i32
    %c0_i32_0 = arith.constant 0 : i32
    %c0_i32_1 = arith.constant 0 : i32
    return %c0_i32, %c0_i32_0 : i32, i32
  }
  func.func @transform_3(%arg0: i32, %arg1: i32) -> (i32, i32, i32) {
    %c0_i32 = arith.constant 0 : i32
    %c0_i32_0 = arith.constant 0 : i32
    return %arg0, %c0_i32, %arg1 : i32, i32, i32
  }
  func.func @transform_4(%arg0: i32, %arg1: i32) -> (i32, i32, i32) {
    %c0_i32 = arith.constant 0 : i32
    %c0_i32_0 = arith.constant 0 : i32
    return %arg0, %c0_i32, %arg1 : i32, i32, i32
  }
  func.func @transform_5(%arg0: i32, %arg1: i32) -> (i32, i32, i32) {
    %c0_i32 = arith.constant 0 : i32
    %c0_i32_0 = arith.constant 0 : i32
    return %arg0, %c0_i32, %arg1 : i32, i32, i32
  }
}

</mosaic_0001>

<llo_original>
// kernel: tpu_custom_call.1
$region0: #{tpu_custom_call.1}
  #allocation0 [shape = 'u32[]', space=smem, size = 0x4, offset = 0x4, fixed_abs, tag = 'smem constant byte address 0x4 - core index']
  #allocation1 [shape = 'u32[72,128]{1,0:T(1,128)}', space=vmem, size = 0x9000, scoped, tag = 'internal scratch']
  %s0 = inlined_call_operand.vmem [shape: f32[2,1,24,16], index: 0, kind: input, shape index: {}]
  %s1 = inlined_call_operand.vmem [shape: f32[16,256], index: 1, kind: input, shape index: {}]
  %s2 = inlined_call_operand.vmem [shape: f32[1,256], index: 2, kind: input, shape index: {}]
  %s3 = inlined_call_operand.vmem [shape: f32[2,5,256], index: 3, kind: input, shape index: {}]
  %s4 = inlined_call_operand.vmem [shape: f32[2,5,256], index: 4, kind: output, shape index: {0}]
  %s5 = inlined_call_operand.vmem [shape: f32[2,5,256], index: 5, kind: output, shape index: {1}]
  %6 = xla_tuple %s4, %s5
  %s7 = sld [smem:[#allocation0]]
  $region57: #{tpu_custom_call.1} parent=0
    _
  %s9 = ssub.s32 1, %s7
  %s10 = scalar_select 0, %s9, %s7
  loop: start=0, step=1, limit=4
  $region2: #{tpu_custom_call.1} parent=0 // loop_pre_header
    _
  $region3: #{tpu_custom_call.1} parent=0 // loop_header
    %s12 = sphi 0, %s16
    %p13 = scmp.ge.s32.totalorder %s12, 4
    %s19 = sphi 0, %s31
    %s20 = sphi 0, %s27
    %s21 = sphi 0, %s19
    %s22 = sphi 0, %s20
    %s23 = sphi 0, %s21
    %s24 = sphi 0, %s22
    %s36 = sphi 0, %s38
    %s39 = sphi 0, %s36
    %s40 = sphi 0, %s39
    %s56 = sphi 0, %s40
    %s60 = sphi 0, %s60
    %s62 = sphi 0, %s60
    %s63 = sphi 0, %s62
    %s77 = sphi 0, %s63
    %s81 = sphi 0, %s81
    %s83 = sphi 0, %s81
    %s84 = sphi 0, %s83
    %s98 = sphi 0, %s84
    %s106 = sphi 0, %s108
    %s109 = sphi 0, %s106
    %s110 = sphi 0, %s109
    %s126 = sphi 0, %s110
    %s134 = sphi 0, %s136
    %s137 = sphi 0, %s134
    %s138 = sphi 0, %s137
    %s154 = sphi 0, %s138
    %s162 = sphi 0, %s164
    %s165 = sphi 0, %s162
    %s166 = sphi 0, %s165
    %s182 = sphi 0, %s166
  $region4: #{tpu_custom_call.1} parent=0 // loop_header_branch
    %15 = sbr.rel (%p13) target = $region8
  $region5: #{tpu_custom_call.1} parent=0 // loop_body
    %s17 = ssub.s32 %s12, 1
    %s18 = ssub.s32 %s12, 2
    %s25 = sadd.s32 1, %s20
    %p26 = scmp.ge.s32.totalorder %s25, 1
    %s27 = scalar_select %p26, 0, %s25
    %s28 = sadd.s32 1, %s19
    %s29 = scalar_select %p26, %s28, %s19
    %p30 = scmp.ge.s32.totalorder %s29, 2
    %s31 = scalar_select %p30, 0, %s29
    %s32 = ssub.s32 %s19, %s31
    %s33 = ssub.s32 %s20, %s27
    %s34 = sor.u32 %s32, %s33
    %p35 = scmp.eq.s32.totalorder %s34, 0
    %s37 = sadd.s32 %s36, 1
    %s38 = scalar_select %p35, %s36, %s37
    %p41 = pneg %p35
    %p42 = scmp.eq.s32.totalorder %s12, 1
    %p43 = por %p41, %p42
    %p44 = scmp.ne.s32.totalorder %s36, %s39
    %p45 = scmp.eq.s32.totalorder %s12, 0
    %p46 = por %p44, %p45
    %p47 = scmp.ne.s32.totalorder %s36, %s39
    %p48 = scmp.eq.s32.totalorder %s17, 1
    %p49 = por %p47, %p48
    %p50 = scmp.ne.s32.totalorder %s39, %s40
    %p51 = scmp.eq.s32.totalorder %s17, 0
    %p52 = por %p50, %p51
    %p53 = scmp.ne.s32.totalorder %s39, %s40
    %p54 = scmp.eq.s32.totalorder %s18, 1
    %p55 = por %p53, %p54
    %p57 = scmp.ne.s32.totalorder %s40, %s56
    %p58 = scmp.eq.s32.totalorder %s18, 0
    %p59 = por %p57, %p58
    %s61 = sadd.s32 %s60, 1
    %p64 = scmp.eq.s32.totalorder %s12, 1
    %p65 = scmp.ne.s32.totalorder %s60, %s62
    %p66 = scmp.eq.s32.totalorder %s12, 0
    %p67 = por %p65, %p66
    %p68 = scmp.ne.s32.totalorder %s60, %s62
    %p69 = scmp.eq.s32.totalorder %s17, 1
    %p70 = por %p68, %p69
    %p71 = scmp.ne.s32.totalorder %s62, %s63
    %p72 = scmp.eq.s32.totalorder %s17, 0
    %p73 = por %p71, %p72
    %p74 = scmp.ne.s32.totalorder %s62, %s63
    %p75 = scmp.eq.s32.totalorder %s18, 1
    %p76 = por %p74, %p75
    %p78 = scmp.ne.s32.totalorder %s63, %s77
    %p79 = scmp.eq.s32.totalorder %s18, 0
    %p80 = por %p78, %p79
    %s82 = sadd.s32 %s81, 1
    %p85 = scmp.eq.s32.totalorder %s12, 1
    %p86 = scmp.ne.s32.totalorder %s81, %s83
    %p87 = scmp.eq.s32.totalorder %s12, 0
    %p88 = por %p86, %p87
    %p89 = scmp.ne.s32.totalorder %s81, %s83
    %p90 = scmp.eq.s32.totalorder %s17, 1
    %p91 = por %p89, %p90
    %p92 = scmp.ne.s32.totalorder %s83, %s84
    %p93 = scmp.eq.s32.totalorder %s17, 0
    %p94 = por %p92, %p93
    %p95 = scmp.ne.s32.totalorder %s83, %s84
    %p96 = scmp.eq.s32.totalorder %s18, 1
    %p97 = por %p95, %p96
    %p99 = scmp.ne.s32.totalorder %s84, %s98
    %p100 = scmp.eq.s32.totalorder %s18, 0
    %p101 = por %p99, %p100
    %s102 = ssub.s32 %s19, %s31
    %s103 = ssub.s32 %s20, %s27
    %s104 = sor.u32 %s102, %s103
    %p105 = scmp.eq.s32.totalorder %s104, 0
    %s107 = sadd.s32 %s106, 1
    %s108 = scalar_select %p105, %s106, %s107
    %p111 = pneg %p105
    %p112 = scmp.eq.s32.totalorder %s12, 1
    %p113 = por %p111, %p112
    %p114 = scmp.ne.s32.totalorder %s106, %s109
    %p115 = scmp.eq.s32.totalorder %s12, 0
    %p116 = por %p114, %p115
    %p117 = scmp.ne.s32.totalorder %s106, %s109
    %p118 = scmp.eq.s32.totalorder %s17, 1
    %p119 = por %p117, %p118
    %p120 = scmp.ne.s32.totalorder %s109, %s110
    %p121 = scmp.eq.s32.totalorder %s17, 0
    %p122 = por %p120, %p121
    %p123 = scmp.ne.s32.totalorder %s109, %s110
    %p124 = scmp.eq.s32.totalorder %s18, 1
    %p125 = por %p123, %p124
    %p127 = scmp.ne.s32.totalorder %s110, %s126
    %p128 = scmp.eq.s32.totalorder %s18, 0
    %p129 = por %p127, %p128
    %s130 = ssub.s32 %s19, %s31
    %s131 = ssub.s32 %s20, %s27
    %s132 = sor.u32 %s130, %s131
    %p133 = scmp.eq.s32.totalorder %s132, 0
    %s135 = sadd.s32 %s134, 1
    %s136 = scalar_select %p133, %s134, %s135
    %p139 = pneg %p133
    %p140 = scmp.eq.s32.totalorder %s12, 1
    %p141 = por %p139, %p140
    %p142 = scmp.ne.s32.totalorder %s134, %s137
    %p143 = scmp.eq.s32.totalorder %s12, 0
    %p144 = por %p142, %p143
    %p145 = scmp.ne.s32.totalorder %s134, %s137
    %p146 = scmp.eq.s32.totalorder %s17, 1
    %p147 = por %p145, %p146
    %p148 = scmp.ne.s32.totalorder %s137, %s138
    %p149 = scmp.eq.s32.totalorder %s17, 0
    %p150 = por %p148, %p149
    %p151 = scmp.ne.s32.totalorder %s137, %s138
    %p152 = scmp.eq.s32.totalorder %s18, 1
    %p153 = por %p151, %p152
    %p155 = scmp.ne.s32.totalorder %s138, %s154
    %p156 = scmp.eq.s32.totalorder %s18, 0
    %p157 = por %p155, %p156
    %s158 = ssub.s32 %s19, %s31
    %s159 = ssub.s32 %s20, %s27
    %s160 = sor.u32 %s158, %s159
    %p161 = scmp.eq.s32.totalorder %s160, 0
    %s163 = sadd.s32 %s162, 1
    %s164 = scalar_select %p161, %s162, %s163
    %p167 = pneg %p161
    %p168 = scmp.eq.s32.totalorder %s12, 1
    %p169 = por %p167, %p168
    %p170 = scmp.ne.s32.totalorder %s162, %s165
    %p171 = scmp.eq.s32.totalorder %s12, 0
    %p172 = por %p170, %p171
    %p173 = scmp.ne.s32.totalorder %s162, %s165
    %p174 = scmp.eq.s32.totalorder %s17, 1
    %p175 = por %p173, %p174
    %p176 = scmp.ne.s32.totalorder %s165, %s166
    %p177 = scmp.eq.s32.totalorder %s17, 0
    %p178 = por %p176, %p177
    %p179 = scmp.ne.s32.totalorder %s165, %s166
    %p180 = scmp.eq.s32.totalorder %s18, 1
    %p181 = por %p179, %p180
    %p183 = scmp.ne.s32.totalorder %s166, %s182
    %p184 = scmp.eq.s32.totalorder %s18, 0
    %p185 = por %p183, %p184
    %p186 = scmp.le.s32.totalorder 1, %s12
    %p187 = scmp.lt.s32.totalorder %s12, 3
    %p188 = pnand %p186, %p187
    %p189 = pneg %p188
    // Predicated region
    $region9: #{tpu_custom_call.1} parent=5 // pred_check
      _
    $region10: #{tpu_custom_call.1} parent=5 // pred_check_branch
      %191 = sbr.rel (%p188) target = $region12
    $region11: #{tpu_custom_call.1} parent=5 // pred_region
      %s192 = ssub.s32 %s12, 1
      // Predicated region
      $region13: #{tpu_custom_call.1} parent=11 // pred_check
        %p193 = pneg %p73
      $region14: #{tpu_custom_call.1} parent=11 // pred_check_branch
        %195 = sbr.rel (%p193) target = $region16
      $region15: #{tpu_custom_call.1} parent=11 // pred_region
        _
      $region16: #{tpu_custom_call.1} parent=11 // pred_fallthru
        _
      // Predicated region
      $region17: #{tpu_custom_call.1} parent=11 // pred_check
        %p196 = pneg %p94
      $region18: #{tpu_custom_call.1} parent=11 // pred_check_branch
        %198 = sbr.rel (%p196) target = $region20
      $region19: #{tpu_custom_call.1} parent=11 // pred_region
        _
      $region20: #{tpu_custom_call.1} parent=11 // pred_fallthru
        _
    $region12: #{tpu_custom_call.1} parent=5 // pred_fallthru
      _
    %p199 = scmp.lt.s32.totalorder %s12, 2
    // Predicated region
    $region21: #{tpu_custom_call.1} parent=5 // pred_check
      %p200 = pneg %p199
    $region22: #{tpu_custom_call.1} parent=5 // pred_check_branch
      %202 = sbr.rel (%p200) target = $region24
    $region23: #{tpu_custom_call.1} parent=5 // pred_region
      // Predicated region
      $region25: #{tpu_custom_call.1} parent=23 // pred_check
        %p203 = pneg %p46
      $region26: #{tpu_custom_call.1} parent=23 // pred_check_branch
        %205 = sbr.rel (%p203) target = $region28
      $region27: #{tpu_custom_call.1} parent=23 // pred_region
        %p206 = scmp.lt.s32.totalorder %s19, 1
        %s207 = scalar_select %p206, %s19, 1
        %p208 = scmp.lt.s32.totalorder %s20, 0
        %s209 = scalar_select %p208, %s20, 0
        %s210 = smul.addr %s209, 3
        %s211 = smul.addr %s207, 3
        %s212 = sadd.s32 %s210, %s211
        %s213 = smul.addr %s212, 8
        %s214 = scalar_lea.vmem %s0, %s213
      $region28: #{tpu_custom_call.1} parent=23 // pred_fallthru
        _
      // Predicated region
      $region29: #{tpu_custom_call.1} parent=23 // pred_check
        %p215 = pneg %p116
      $region30: #{tpu_custom_call.1} parent=23 // pred_check_branch
        %217 = sbr.rel (%p215) target = $region32
      $region31: #{tpu_custom_call.1} parent=23 // pred_region
        %s218 = smul.u32 2, %s20
        %p219 = scmp.lt.s32.totalorder %s19, 1
        %s220 = scalar_select %p219, %s19, 1
        %p221 = scmp.lt.s32.totalorder %s218, 1
        %s222 = scalar_select %p221, %s218, 1
        %s223 = smul.addr %s220, 2
        %s224 = sadd.s32 %s222, %s223
        %s225 = smul.addr %s224, 8
        %s226 = scalar_lea.vmem %s3, %s225
        %s227 = smul.u32 2, %s20
      $region32: #{tpu_custom_call.1} parent=23 // pred_fallthru
        _
    $region24: #{tpu_custom_call.1} parent=5 // pred_fallthru
      _
    %p228 = scmp.le.s32.totalorder 1, %s12
    %p229 = scmp.lt.s32.totalorder %s12, 3
    %p230 = pnand %p228, %p229
    %p231 = pneg %p230
    // Predicated region
    $region33: #{tpu_custom_call.1} parent=5 // pred_check
      _
    $region34: #{tpu_custom_call.1} parent=5 // pred_check_branch
      %233 = sbr.rel (%p230) target = $region36
    $region35: #{tpu_custom_call.1} parent=5 // pred_region
      %s234 = ssub.s32 %s12, 1
      %p235 = scmp.lt.s32.totalorder %s21, 1
      %s236 = scalar_select %p235, %s21, 1
      %p237 = scmp.lt.s32.totalorder %s22, 0
      %s238 = scalar_select %p237, %s22, 0
      %s239 = smul.addr %s238, 3
      %s240 = smul.addr %s236, 3
      %s241 = sadd.s32 %s239, %s240
      %s242 = smul.addr %s241, 8
      %s243 = scalar_lea.vmem %s0, %s242
      %p244 = pneg %p52
      %p245 = pneg %p49
      %p246 = pneg %p73
      %p247 = pneg %p70
      %p248 = pneg %p94
      %p249 = pneg %p91
      %s250 = smul.u32 2, %s22
      %p251 = scmp.lt.s32.totalorder %s21, 1
      %s252 = scalar_select %p251, %s21, 1
      %p253 = scmp.lt.s32.totalorder %s250, 1
      %s254 = scalar_select %p253, %s250, 1
      %s255 = smul.addr %s252, 2
      %s256 = sadd.s32 %s254, %s255
      %s257 = smul.addr %s256, 8
      %s258 = scalar_lea.vmem %s3, %s257
      %p259 = pneg %p122
      %p260 = pneg %p119
      %p261 = pneg %p150
      %p262 = pneg %p147
      %s263 = smul.u32 2, %s22
      %p264 = scmp.lt.s32.totalorder %s21, 1
      %s265 = scalar_select %p264, %s21, 1
      %p266 = scmp.lt.s32.totalorder %s263, 1
      %s267 = scalar_select %p266, %s263, 1
      %s268 = smul.addr %s265, 2
      %s269 = sadd.s32 %s267, %s268
      %s270 = smul.addr %s269, 8
      %s271 = scalar_lea.vmem %s4, %s270
      %p272 = pneg %p178
      %p273 = pneg %p175
      %s274 = smul.u32 2, %s22
      %p275 = scmp.lt.s32.totalorder %s21, 1
      %s276 = scalar_select %p275, %s21, 1
      %p277 = scmp.lt.s32.totalorder %s274, 1
      %s278 = scalar_select %p277, %s274, 1
      %s279 = smul.addr %s276, 2
      %s280 = sadd.s32 %s278, %s279
      %s281 = smul.addr %s280, 8
      %s282 = scalar_lea.vmem %s5, %s281
      %p283 = scmp.lt.s32.totalorder %s21, 1
      %s284 = scalar_select %p283, %s21, 1
      %p285 = scmp.lt.s32.totalorder %s22, 0
      %s286 = scalar_select %p285, %s22, 0
      %s287 = smul.addr %s286, 3
      %s288 = smul.addr %s284, 3
      %s289 = sadd.s32 %s287, %s288
      %s290 = smul.addr %s289, 8
      %s291 = scalar_lea.vmem %s0, %s290
      %s292 = smul.u32 2, %s22
      %p293 = scmp.lt.s32.totalorder %s21, 1
      %s294 = scalar_select %p293, %s21, 1
      %p295 = scmp.lt.s32.totalorder %s292, 1
      %s296 = scalar_select %p295, %s292, 1
      %s297 = smul.addr %s294, 2
      %s298 = sadd.s32 %s296, %s297
      %s299 = smul.addr %s298, 8
      %s300 = scalar_lea.vmem %s3, %s299
      %s301 = smul.u32 2, %s22
      %s302 = smul.u32 2, %s22
      %p303 = scmp.lt.s32.totalorder %s21, 1
      %s304 = scalar_select %p303, %s21, 1
      %p305 = scmp.lt.s32.totalorder %s302, 1
      %s306 = scalar_select %p305, %s302, 1
      %s307 = smul.addr %s304, 2
      %s308 = sadd.s32 %s306, %s307
      %s309 = smul.addr %s308, 8
      %s310 = scalar_lea.vmem %s4, %s309
      %s311 = smul.u32 2, %s22
      %s312 = smul.u32 2, %s22
      %p313 = scmp.lt.s32.totalorder %s21, 1
      %s314 = scalar_select %p313, %s21, 1
      %p315 = scmp.lt.s32.totalorder %s312, 1
      %s316 = scalar_select %p315, %s312, 1
      %s317 = smul.addr %s314, 2
      %s318 = sadd.s32 %s316, %s317
      %s319 = smul.addr %s318, 8
      %s320 = scalar_lea.vmem %s5, %s319
      %s321 = smul.u32 2, %s22
      %v322 = vld [vmem:[%s291] sm:$0xff]
      %v323 = vld [vmem:[%s291 + $0x8] sm:$0xff]
      %v324 = vld [vmem:[%s291 + $0x10] sm:$0xff]
      %v325 = vld [vmem:[%s1] sm:$0xff]
      %v326 = vld [vmem:[%s1 + $0x8] sm:$0xff]
      %v327 = vld [vmem:[%s1 + $0x10] sm:$0xff]
      %v328 = vld [vmem:[%s1 + $0x18] sm:$0xff]
      %vm329 = vcmask 130048
      %v331 = vsel %vm329, %v322, 0
      %v334 = vsel %vm329, %v323, 0
      %v337 = vsel %vm329, %v324, 0
      %339 = vmatpush.msra.mxu0 0.0
      %340 = vmatpush.msra.mxu0 0.0
      %341 = vmatpush.msra.mxu0 0.0
      %342 = vmatpush.msra.mxu0 0.0
      %343 = vmatpush.msra.mxu0 0.0
      %344 = vmatpush.msra.mxu0 0.0
      %345 = vmatpush.msra.mxu0 0.0
      %346 = vmatpush.msra.mxu0 0.0
      %347 = vmatpush.msra.mxu0 0.0
      %348 = vmatpush.msra.mxu0 0.0
      %349 = vmatpush.msra.mxu0 0.0
      %350 = vmatpush.msra.mxu0 0.0
      %351 = vmatpush.msra.mxu0 0.0
      %352 = vmatpush.msra.mxu0 0.0
      %353 = vmatpush.msra.mxu0 %v327
      %354 = vmatpush.msra.mxu0 %v325
      %355 = vmatmul.f32.gmra.mxu0 %v331
      %v356 = vpop.f32.mrf.mxu0
      %v357 = vadd.f32 0.0, %v356
      %358 = vmatmul.f32.gmra.mxu0 %v334
      %v359 = vpop.f32.mrf.mxu0
      %v360 = vadd.f32 0.0, %v359
      %361 = vmatmul.f32.gmra.mxu0 %v337
      %v362 = vpop.f32.mrf.mxu0
      %v363 = vadd.f32 0.0, %v362
      %364 = vdwg.mxu0
      %365 = vmatpush.msra.mxu0 0.0
      %366 = vmatpush.msra.mxu0 0.0
      %367 = vmatpush.msra.mxu0 0.0
      %368 = vmatpush.msra.mxu0 0.0
      %369 = vmatpush.msra.mxu0 0.0
      %370 = vmatpush.msra.mxu0 0.0
      %371 = vmatpush.msra.mxu0 0.0
      %372 = vmatpush.msra.mxu0 0.0
      %373 = vmatpush.msra.mxu0 0.0
      %374 = vmatpush.msra.mxu0 0.0
      %375 = vmatpush.msra.mxu0 0.0
      %376 = vmatpush.msra.mxu0 0.0
      %377 = vmatpush.msra.mxu0 0.0
      %378 = vmatpush.msra.mxu0 0.0
      %379 = vmatpush.msra.mxu0 %v328
      %380 = vmatpush.msra.mxu0 %v326
      %381 = vmatmul.f32.gmra.mxu0 %v331
      %v382 = vpop.f32.mrf.mxu0
      %v383 = vadd.f32 0.0, %v382
      %384 = vmatmul.f32.gmra.mxu0 %v334
      %v385 = vpop.f32.mrf.mxu0
      %v386 = vadd.f32 0.0, %v385
      %387 = vmatmul.f32.gmra.mxu0 %v337
      %v388 = vpop.f32.mrf.mxu0
      %v389 = vadd.f32 0.0, %v388
      %390 = vdwg.mxu0
      %v391 = vld [vmem:[%s2] sm:$0x3]
      %v393 = vperm.slane %v391, 0
      %v394 = vperm.slane %v391, 1
      %v397 = vmul.f32 %v393, %v360
      %v398 = vmul.f32 %v394, %v386
      %v399 = vadd.f32 %v357, %v397
      %v400 = vadd.f32 %v383, %v398
      %v401 = vfloor.f32 %v399
      %v402 = vfloor.f32 %v400
      %v403 = vsub.f32 %v399, %v401
      %v404 = vsub.f32 %v400, %v402
      %v405 = vmul.f32 %v403, 6.2831855
      %v406 = vmul.f32 %v404, 6.2831855
      %v407 = vand.u32 2147483647, %v405
      %vm408 = vcmp.le.f32.partialorder %v407, 0.7853982
      %vm409 = vcmp.lt.s32.totalorder %v405, 0
      %v410 = vand.u32 %v405, 2139095040
      %v411 = vshrl.u32 %v410, 23
      %v412 = vsub.s32 %v411, 127
      %v413 = vand.u32 2147483647, %v405
      %v414 = vand.u32 %v413, 8388607
      %v415 = vor.u32 %v414, 8388608
      %v416 = vsub.s32 0, %v415
      %v417 = vadd.s32 %v412, 1
      %vm418 = vcmp.gt.s32.totalorder %v417, 0
      %v419 = vsel %vm418, %v417, 0
      %v420 = vshrl.u32 %v419, 5
      %v421 = vand.u32 %v419, 31
      %v422 = vsub.s32 32, %v421
      %v423 = vshrl.u32 683565275, %v422
      %v424 = vshll.u32 683565275, %v421
      %v425 = vshrl.u32 2475754826, %v422
      %v426 = vor.u32 %v424, %v425
      %v427 = vshll.u32 2475754826, %v421
      %v428 = vshrl.u32 2131351028, %v422
      %v429 = vor.u32 %v427, %v428
      %v430 = vshll.u32 2131351028, %v421
      %v431 = vshrl.u32 2102212464, %v422
      %v432 = vor.u32 %v430, %v431
      %v433 = vshll.u32 2102212464, %v421
      %v434 = vshrl.u32 920167782, %v422
      %v435 = vor.u32 %v433, %v434
      %v436 = vshll.u32 920167782, %v421
      %v437 = vshrl.u32 1326507024, %v422
      %v438 = vor.u32 %v436, %v437
      %vm439 = vcmp.lt.s32.totalorder %v420, 1
      %vm440 = vcmp.lt.s32.totalorder %v420, 2
      %vm441 = vcmp.lt.s32.totalorder %v420, 3
      %vm442 = vcmp.lt.s32.totalorder %v420, 4
      %v443 = vsel %vm439, %v423, %v426
      %v444 = vsel %vm442, %v432, 2102212464
      %v445 = vsel %vm441, %v429, %v444
      %v446 = vsel %vm440, %v443, %v445
      %v447 = vsel %vm439, %v426, %v429
      %v448 = vsel %vm442, %v435, 920167782
      %v449 = vsel %vm441, %v432, %v448
      %v450 = vsel %vm440, %v447, %v449
      %v451 = vsel %vm439, %v429, %v432
      %v452 = vsel %vm442, %v438, 1326507024
      %v453 = vsel %vm441, %v435, %v452
      %v454 = vsel %vm440, %v451, %v453
      %v455 = vshll.u32 %v415, 8
      %v456 = vand.u32 %v455, 65535
      %v457 = vshrl.u32 %v455, 16
      %v458 = vand.u32 %v454, 65535
      %v459 = vshrl.u32 %v454, 16
      %v460 = vmul.u32 %v456, %v458
      %v461 = vmul.u32 %v456, %v459
      %v462 = vmul.u32 %v457, %v458
      %v463 = vmul.u32 %v457, %v459
      %v464 = vshll.u32 %v461, 16
      %v465 = vshrl.u32 %v461, 16
      %v466 = vshll.u32 %v462, 16
      %v467 = vshrl.u32 %v462, 16
      %vm468 = vc.u32 %v460, %v464
      %v469 = vsel %vm468, 1, 0
      %v470 = vadd.s32 %v460, %v464
      %v471 = vadd.s32 %v463, %v469
      %vm472 = vc.u32 %v470, %v466
      %v473 = vsel %vm472, 1, 0
      %v474 = vadd.s32 %v470, %v466
      %v475 = vadd.s32 %v471, %v473
      %v476 = vadd.s32 %v475, %v465
      %v477 = vadd.s32 %v476, %v467
      %v478 = vand.u32 %v455, 65535
      %v479 = vshrl.u32 %v455, 16
      %v480 = vand.u32 %v450, 65535
      %v481 = vshrl.u32 %v450, 16
      %v482 = vmul.u32 %v478, %v480
      %v483 = vmul.u32 %v478, %v481
      %v484 = vmul.u32 %v479, %v480
      %v485 = vmul.u32 %v479, %v481
      %v486 = vshll.u32 %v483, 16
      %v487 = vshrl.u32 %v483, 16
      %v488 = vshll.u32 %v484, 16
      %v489 = vshrl.u32 %v484, 16
      %vm490 = vc.u32 %v482, %v486
      %v491 = vsel %vm490, 1, 0
      %v492 = vadd.s32 %v482, %v486
      %v493 = vadd.s32 %v485, %v491
      %vm494 = vc.u32 %v492, %v488
      %v495 = vsel %vm494, 1, 0
      %v496 = vadd.s32 %v492, %v488
      %v497 = vadd.s32 %v493, %v495
      %v498 = vadd.s32 %v497, %v487
      %v499 = vadd.s32 %v498, %v489
      %v500 = vmul.u32 %v455, %v446
      %v501 = vadd.s32 %v477, %v496
      %vm502 = vc.u32 %v477, %v496
      %v503 = vadd.s32 %v499, 1
      %v504 = vsel %vm502, %v503, %v499
      %v505 = vadd.s32 %v500, %v504
      %v506 = vadd.s32 %v505, 536870912
      %v507 = vshrl.u32 %v506, 30
      %v508 = vshll.u32 %v507, 30
      %v509 = vsub.s32 %v505, %v508
      %vm510 = vcmp.lt.s32.totalorder %v509, 0
      %v511 = vsub.s32 0, %v509
      %v512 = vsel %vm510, %v511, %v509
      %v513 = vclz %v512
      %v514 = vsub.s32 %v513, 2
      %vm515 = vcmp.gt.s32.totalorder 0, %v514
      %v516 = vsel %vm515, 0, %v514
      %v517 = vsub.s32 32, %v516
      %v518 = vshll.u32 %v509, %v516
      %v519 = vshrl.u32 %v501, %v517
      %v520 = vor.u32 %v518, %v519
      %v521 = vsub.s32 4294967266, %v516
      %v522 = vadd.s32 %v521, 127
      %v523 = vshll.u32 %v522, 23
      %v524 = vor.u32 4788187, %v523
      %v525 = vand.u32 2147483647, %v524
      %v527 = vcvt.s32.f32 %v520
      %v528 = vmul.f32 %v527, %v525
      %v529 = vxor.u32 %v528, 2147483648
      %v530 = vsel %vm409, %v529, %v528
      %v531 = vsub.s32 4, %v507
      %v532 = vsel %vm409, %v531, %v507
      %v533 = vsel %vm408, %v405, %v530
      %v534 = vsel %vm408, 0, %v532
      %v535 = vmul.f32 %v533, %v533
      %v536 = vmul.f32 %v535, -0.001358992
      %v537 = vadd.f32 %v536, 0.041655596
      %v538 = vmul.f32 %v535, %v537
      %v539 = vadd.f32 %v538, -0.4999988
      %v540 = vmul.f32 %v535, %v539
      %v541 = vadd.f32 1.0, %v540
      %v542 = vmul.f32 %v533, %v533
      %v543 = vmul.f32 %v542, -0.00019511016
      %v544 = vadd.f32 %v543, 0.008332121
      %v545 = vmul.f32 %v542, %v544
      %v546 = vadd.f32 %v545, -0.16666654
      %v547 = vmul.f32 %v542, %v546
      %v548 = vadd.f32 %v547, 1.0
      %v549 = vmul.f32 %v548, %v533
      %vm550 = vweird.f32 %v405
      %v551 = vadd.s32 %v534, 3
      %v552 = vand.u32 %v551, 3
      %vm553 = vcmp.lt.s32.totalorder %v552, 2
      %vm554 = vcmp.eq.s32.totalorder %v552, 0
      %v555 = vxor.u32 %v549, 2147483648
      %v556 = vsel %vm554, %v541, %v555
      %vm557 = vcmp.eq.s32.totalorder %v552, 2
      %v558 = vxor.u32 %v541, 2147483648
      %v559 = vsel %vm557, %v558, %v549
      %v560 = vsel %vm553, %v556, %v559
      %v561 = vsel %vm550, nan, %v560
      %v562 = vand.u32 2147483647, %v406
      %vm563 = vcmp.le.f32.partialorder %v562, 0.7853982
      %vm564 = vcmp.lt.s32.totalorder %v406, 0
      %v565 = vand.u32 %v406, 2139095040
      %v566 = vshrl.u32 %v565, 23
      %v567 = vsub.s32 %v566, 127
      %v568 = vand.u32 2147483647, %v406
      %v569 = vand.u32 %v568, 8388607
      %v570 = vor.u32 %v569, 8388608
      %v571 = vsub.s32 0, %v570
      %v572 = vadd.s32 %v567, 1
      %vm573 = vcmp.gt.s32.totalorder %v572, 0
      %v574 = vsel %vm573, %v572, 0
      %v575 = vshrl.u32 %v574, 5
      %v576 = vand.u32 %v574, 31
      %v577 = vsub.s32 32, %v576
      %v578 = vshrl.u32 683565275, %v577
      %v579 = vshll.u32 683565275, %v576
      %v580 = vshrl.u32 2475754826, %v577
      %v581 = vor.u32 %v579, %v580
      %v582 = vshll.u32 2475754826, %v576
      %v583 = vshrl.u32 2131351028, %v577
      %v584 = vor.u32 %v582, %v583
      %v585 = vshll.u32 2131351028, %v576
      %v586 = vshrl.u32 2102212464, %v577
      %v587 = vor.u32 %v585, %v586
      %v588 = vshll.u32 2102212464, %v576
      %v589 = vshrl.u32 920167782, %v577
      %v590 = vor.u32 %v588, %v589
      %v591 = vshll.u32 920167782, %v576
      %v592 = vshrl.u32 1326507024, %v577
      %v593 = vor.u32 %v591, %v592
      %vm594 = vcmp.lt.s32.totalorder %v575, 1
      %vm595 = vcmp.lt.s32.totalorder %v575, 2
      %vm596 = vcmp.lt.s32.totalorder %v575, 3
      %vm597 = vcmp.lt.s32.totalorder %v575, 4
      %v598 = vsel %vm594, %v578, %v581
      %v599 = vsel %vm597, %v587, 2102212464
      %v600 = vsel %vm596, %v584, %v599
      %v601 = vsel %vm595, %v598, %v600
      %v602 = vsel %vm594, %v581, %v584
      %v603 = vsel %vm597, %v590, 920167782
      %v604 = vsel %vm596, %v587, %v603
      %v605 = vsel %vm595, %v602, %v604
      %v606 = vsel %vm594, %v584, %v587
      %v607 = vsel %vm597, %v593, 1326507024
      %v608 = vsel %vm596, %v590, %v607
      %v609 = vsel %vm595, %v606, %v608
      %v610 = vshll.u32 %v570, 8
      %v611 = vand.u32 %v610, 65535
      %v612 = vshrl.u32 %v610, 16
      %v613 = vand.u32 %v609, 65535
      %v614 = vshrl.u32 %v609, 16
      %v615 = vmul.u32 %v611, %v613
      %v616 = vmul.u32 %v611, %v614
      %v617 = vmul.u32 %v612, %v613
      %v618 = vmul.u32 %v612, %v614
      %v619 = vshll.u32 %v616, 16
      %v620 = vshrl.u32 %v616, 16
      %v621 = vshll.u32 %v617, 16
      %v622 = vshrl.u32 %v617, 16
      %vm623 = vc.u32 %v615, %v619
      %v624 = vsel %vm623, 1, 0
      %v625 = vadd.s32 %v615, %v619
      %v626 = vadd.s32 %v618, %v624
      %vm627 = vc.u32 %v625, %v621
      %v628 = vsel %vm627, 1, 0
      %v629 = vadd.s32 %v625, %v621
      %v630 = vadd.s32 %v626, %v628
      %v631 = vadd.s32 %v630, %v620
      %v632 = vadd.s32 %v631, %v622
      %v633 = vand.u32 %v610, 65535
      %v634 = vshrl.u32 %v610, 16
      %v635 = vand.u32 %v605, 65535
      %v636 = vshrl.u32 %v605, 16
      %v637 = vmul.u32 %v633, %v635
      %v638 = vmul.u32 %v633, %v636
      %v639 = vmul.u32 %v634, %v635
      %v640 = vmul.u32 %v634, %v636
      %v641 = vshll.u32 %v638, 16
      %v642 = vshrl.u32 %v638, 16
      %v643 = vshll.u32 %v639, 16
      %v644 = vshrl.u32 %v639, 16
      %vm645 = vc.u32 %v637, %v641
      %v646 = vsel %vm645, 1, 0
      %v647 = vadd.s32 %v637, %v641
      %v648 = vadd.s32 %v640, %v646
      %vm649 = vc.u32 %v647, %v643
      %v650 = vsel %vm649, 1, 0
      %v651 = vadd.s32 %v647, %v643
      %v652 = vadd.s32 %v648, %v650
      %v653 = vadd.s32 %v652, %v642
      %v654 = vadd.s32 %v653, %v644
      %v655 = vmul.u32 %v610, %v601
      %v656 = vadd.s32 %v632, %v651
      %vm657 = vc.u32 %v632, %v651
      %v658 = vadd.s32 %v654, 1
      %v659 = vsel %vm657, %v658, %v654
      %v660 = vadd.s32 %v655, %v659
      %v661 = vadd.s32 %v660, 536870912
      %v662 = vshrl.u32 %v661, 30
      %v663 = vshll.u32 %v662, 30
      %v664 = vsub.s32 %v660, %v663
      %vm665 = vcmp.lt.s32.totalorder %v664, 0
      %v666 = vsub.s32 0, %v664
      %v667 = vsel %vm665, %v666, %v664
      %v668 = vclz %v667
      %v669 = vsub.s32 %v668, 2
      %vm670 = vcmp.gt.s32.totalorder 0, %v669
      %v671 = vsel %vm670, 0, %v669
      %v672 = vsub.s32 32, %v671
      %v673 = vshll.u32 %v664, %v671
      %v674 = vshrl.u32 %v656, %v672
      %v675 = vor.u32 %v673, %v674
      %v676 = vsub.s32 4294967266, %v671
      %v677 = vadd.s32 %v676, 127
      %v678 = vshll.u32 %v677, 23
      %v679 = vor.u32 4788187, %v678
      %v680 = vand.u32 2147483647, %v679
      %v682 = vcvt.s32.f32 %v675
      %v683 = vmul.f32 %v682, %v680
      %v684 = vxor.u32 %v683, 2147483648
      %v685 = vsel %vm564, %v684, %v683
      %v686 = vsub.s32 4, %v662
      %v687 = vsel %vm564, %v686, %v662
      %v688 = vsel %vm563, %v406, %v685
      %v689 = vsel %vm563, 0, %v687
      %v690 = vmul.f32 %v688, %v688
      %v691 = vmul.f32 %v690, -0.001358992
      %v692 = vadd.f32 %v691, 0.041655596
      %v693 = vmul.f32 %v690, %v692
      %v694 = vadd.f32 %v693, -0.4999988
      %v695 = vmul.f32 %v690, %v694
      %v696 = vadd.f32 1.0, %v695
      %v697 = vmul.f32 %v688, %v688
      %v698 = vmul.f32 %v697, -0.00019511016
      %v699 = vadd.f32 %v698, 0.008332121
      %v700 = vmul.f32 %v697, %v699
      %v701 = vadd.f32 %v700, -0.16666654
      %v702 = vmul.f32 %v697, %v701
      %v703 = vadd.f32 %v702, 1.0
      %v704 = vmul.f32 %v703, %v688
      %vm705 = vweird.f32 %v406
      %v706 = vadd.s32 %v689, 3
      %v707 = vand.u32 %v706, 3
      %vm708 = vcmp.lt.s32.totalorder %v707, 2
      %vm709 = vcmp.eq.s32.totalorder %v707, 0
      %v710 = vxor.u32 %v704, 2147483648
      %v711 = vsel %vm709, %v696, %v710
      %vm712 = vcmp.eq.s32.totalorder %v707, 2
      %v713 = vxor.u32 %v696, 2147483648
      %v714 = vsel %vm712, %v713, %v704
      %v715 = vsel %vm708, %v711, %v714
      %v716 = vsel %vm705, nan, %v715
      %v717 = vmul.f32 %v561, 0.1
      %v718 = vmul.f32 %v716, 0.1
      %v719 = vmul.f32 %v363, 0.003
      %v720 = vmul.f32 %v389, 0.003
      %v721 = vsub.f32 1.0, %v363
      %v722 = vsub.f32 1.0, %v389
      %v723 = vmul.f32 %v721, 0.033333335
      %v724 = vmul.f32 %v722, 0.033333335
      %v725 = vadd.f32 %v719, %v723
      %v726 = vadd.f32 %v720, %v724
      %v727 = vld [vmem:[%s300] sm:$0x1f]
      %v728 = vld [vmem:[%s300 + $0x8] sm:$0x1f]
      %v729 = vperm.slane %v725, 0
      %v730 = vperm.slane %v726, 0
      %v731 = vmul.f32 %v729, %v727
      %v732 = vmul.f32 %v730, %v728
      %v733 = vperm.slane %v363, 0
      %v734 = vperm.slane %v389, 0
      %v735 = vmul.f32 %v717, %v733
      %v736 = vmul.f32 %v718, %v734
      %v737 = vadd.f32 %v735, %v731
      %v738 = vadd.f32 %v736, %v732
      %739 = vst [vmem:[%s310] sm:$0x1f] %v737
      %740 = vst [vmem:[%s310 + $0x8] sm:$0x1f] %v738
      %741 = vst [vmem:[%s320] sm:$0x1f] %v731
      %742 = vst [vmem:[%s320 + $0x8] sm:$0x1f] %v732
      %s743 = smul.u32 2, %s22
      %p744 = scmp.lt.s32.totalorder %s21, 1
      %s745 = scalar_select %p744, %s21, 1
      %p746 = scmp.lt.s32.totalorder %s743, 1
      %s747 = scalar_select %p746, %s743, 1
      %s748 = smul.addr %s745, 2
      %s749 = sadd.s32 %s747, %s748
      %s750 = smul.addr %s749, 8
      %s751 = scalar_lea.vmem %s4, %s750
      %s752 = smul.u32 2, %s22
      %p753 = scmp.lt.s32.totalorder %s21, 1
      %s754 = scalar_select %p753, %s21, 1
      %p755 = scmp.lt.s32.totalorder %s752, 1
      %s756 = scalar_select %p755, %s752, 1
      %s757 = smul.addr %s754, 2
      %s758 = sadd.s32 %s756, %s757
      %s759 = smul.addr %s758, 8
      %s760 = scalar_lea.vmem %s5, %s759
      // Predicated region
      $region37: #{tpu_custom_call.1} parent=35 // pred_check
        %p761 = pneg %p147
      $region38: #{tpu_custom_call.1} parent=35 // pred_check_branch
        %763 = sbr.rel (%p761) target = $region40
      $region39: #{tpu_custom_call.1} parent=35 // pred_region
        %s764 = smul.u32 2, %s22
      $region40: #{tpu_custom_call.1} parent=35 // pred_fallthru
        _
      // Predicated region
      $region41: #{tpu_custom_call.1} parent=35 // pred_check
        %p765 = pneg %p175
      $region42: #{tpu_custom_call.1} parent=35 // pred_check_branch
        %767 = sbr.rel (%p765) target = $region44
      $region43: #{tpu_custom_call.1} parent=35 // pred_region
        %s768 = smul.u32 2, %s22
      $region44: #{tpu_custom_call.1} parent=35 // pred_fallthru
        _
    $region36: #{tpu_custom_call.1} parent=5 // pred_fallthru
      _
    %p769 = scmp.le.s32.totalorder 2, %s12
    // Predicated region
    $region45: #{tpu_custom_call.1} parent=5 // pred_check
      %p770 = pneg %p769
    $region46: #{tpu_custom_call.1} parent=5 // pred_check_branch
      %772 = sbr.rel (%p770) target = $region48
    $region47: #{tpu_custom_call.1} parent=5 // pred_region
      %s773 = ssub.s32 %s12, 2
      // Predicated region
      $region49: #{tpu_custom_call.1} parent=47 // pred_check
        %p774 = pneg %p153
      $region50: #{tpu_custom_call.1} parent=47 // pred_check_branch
        %776 = sbr.rel (%p774) target = $region52
      $region51: #{tpu_custom_call.1} parent=47 // pred_region
        %s777 = smul.u32 2, %s24
        %p778 = scmp.lt.s32.totalorder %s23, 1
        %s779 = scalar_select %p778, %s23, 1
        %p780 = scmp.lt.s32.totalorder %s777, 1
        %s781 = scalar_select %p780, %s777, 1
        %s782 = smul.addr %s779, 2
        %s783 = sadd.s32 %s781, %s782
        %s784 = smul.addr %s783, 8
        %s785 = scalar_lea.vmem %s4, %s784
      $region52: #{tpu_custom_call.1} parent=47 // pred_fallthru
        _
      // Predicated region
      $region53: #{tpu_custom_call.1} parent=47 // pred_check
        %p786 = pneg %p181
      $region54: #{tpu_custom_call.1} parent=47 // pred_check_branch
        %788 = sbr.rel (%p786) target = $region56
      $region55: #{tpu_custom_call.1} parent=47 // pred_region
        %s789 = smul.u32 2, %s24
        %p790 = scmp.lt.s32.totalorder %s23, 1
        %s791 = scalar_select %p790, %s23, 1
        %p792 = scmp.lt.s32.totalorder %s789, 1
        %s793 = scalar_select %p792, %s789, 1
        %s794 = smul.addr %s791, 2
        %s795 = sadd.s32 %s793, %s794
        %s796 = smul.addr %s795, 8
        %s797 = scalar_lea.vmem %s5, %s796
      $region56: #{tpu_custom_call.1} parent=47 // pred_fallthru
        _
    $region48: #{tpu_custom_call.1} parent=5 // pred_fallthru
      _
  $region6: #{tpu_custom_call.1} parent=0 // loop_footer
    %s16 = sadd.s32 1, %s12
  $region7: #{tpu_custom_call.1} parent=0 // loop_footer_branch
    %11 = sbr.rel target = $region3
  $region8: #{tpu_custom_call.1} parent=0 // loop_exit
    _

</llo_original>
